<compile_context>
chip_gen: v5e
topology: v5e:2x2
jax: 0.10.0
libtpu: 0.0.40
codegen_flags: <defaults>
</compile_context>

<pallas_src>
import jax
import jax.numpy as jnp
from jax.experimental import pallas as pl
from jax.experimental.pallas import tpu as pltpu


_SUBLANE = 16                      # multiple of 8 (f32) and 16 (bf16) packing
_LANE = 128
_VMEM_BUDGET = 48 * 1024 * 1024    # safe on v5e/v6e (128 MiB) and v7x (64 MiB/TC)


def _round_up(x, m):
    return ((x + m - 1) // m) * m


def _pick_tile_m(M, requested):
    """Largest tile <= requested (multiple of _SUBLANE), preferring one that
    divides M exactly so no M padding / post-kernel slice copy is needed."""
    cap = max(_SUBLANE, (requested // _SUBLANE) * _SUBLANE)
    if M <= cap:
        return _round_up(M, _SUBLANE)
    for t in range(cap, max(cap // 2, _SUBLANE) - 1, -_SUBLANE):
        if M % t == 0:
            return t
    return cap


def _patch_embed_kernel(patches_ref, w_ref, b_ref, out_ref):
    # patches_ref: (TILE_M, K_p)       one tile of flattened patches
    # w_ref:       (K_p, dmodel_p)     grid-invariant -> VMEM resident
    # b_ref:       (1, dmodel_p)       f32 bias, grid-invariant
    # out_ref:     (TILE_M, dmodel_p)  lane-dense (dmodel_p % 128 == 0)
    acc = jnp.dot(patches_ref[...], w_ref[...],
                  preferred_element_type=jnp.float32)
    out_ref[...] = (acc + b_ref[...]).astype(out_ref.dtype)


def patch_embeddings(x, weight, bias, patch_size, *, tile_m=1024,
                     compute_dtype=None):
    """x: (B, C, H, W) NCHW.  weight: (dmodel, C, p, p).  bias: (dmodel,).
    Returns (B, (H//p)*(W//p), dmodel), identical to
    nn.Conv2d(C, dmodel, p, stride=p) + permute(0,2,3,1) + view."""
    B, C, H, W = x.shape
    dmodel = weight.shape[0]
    p = patch_size
    assert H % p == 0 and W % p == 0, "H and W must be divisible by patch_size"
    hp, wp = H // p, W // p
    K = C * p * p
    M = B * hp * wp
    out_dtype = x.dtype

    # bf16 operands + f32 MXU accumulation by default for f32 inputs.
    if compute_dtype is None:
        compute_dtype = jnp.bfloat16 if x.dtype == jnp.float32 else x.dtype
    csize = jnp.dtype(compute_dtype).itemsize
    osize = jnp.dtype(out_dtype).itemsize

    # --- glue: extract non-overlapping patches in (C, p, p) flatten order.
    # The cast happens before the transpose so XLA's copy fusion reads f32 once
    # and writes half-width patches.  (Full in-kernel fusion: see TODO above.)
    patches = x.astype(compute_dtype).reshape(B, C, hp, p, wp, p)
    patches = patches.transpose(0, 2, 4, 1, 3, 5).reshape(M, K)

    # Conv2d weight (dmodel, C, p, p) -> (K, dmodel), same (C, p, p) order.
    w_mat = weight.reshape(dmodel, K).T.astype(compute_dtype)
    b_mat = bias.astype(jnp.float32).reshape(1, dmodel)

    # Pad the contraction dim to a lane multiple (zero rows/cols are inert).
    K_p = _round_up(K, _LANE)
    if K_p != K:
        patches = jnp.pad(patches, ((0, 0), (0, K_p - K)))
        w_mat = jnp.pad(w_mat, ((0, K_p - K), (0, 0)))

    # Lane-dense output: pad dmodel up to a multiple of 128 (unmasked stores).
    dmodel_p = _round_up(dmodel, _LANE)
    if dmodel_p != dmodel:
        w_mat = jnp.pad(w_mat, ((0, 0), (0, dmodel_p - dmodel)))
        b_mat = jnp.pad(b_mat, ((0, 0), (0, dmodel_p - dmodel)))

    # --- M tiling: budget the double-buffered working set explicitly so the
    # biggest safe tile is used on every generation (v7x has only 64 MiB/TC).
    fixed_bytes = 2 * K_p * dmodel_p * csize + 2 * dmodel_p * 4   # weight+bias
    per_row_bytes = 2 * K_p * csize + 2 * dmodel_p * osize        # in + out
    if _VMEM_BUDGET > fixed_bytes + per_row_bytes * _SUBLANE:
        max_rows = (_VMEM_BUDGET - fixed_bytes) // per_row_bytes
    else:
        # Weight alone nearly fills the budget.
        # TODO(synk): add an N grid axis tiling dmodel_p for very large dmodel.
        max_rows = _SUBLANE
    tile = _pick_tile_m(M, min(int(tile_m), int(max_rows)))

    m_pad = _round_up(M, tile)
    if m_pad != M:
        patches = jnp.pad(patches, ((0, m_pad - M), (0, 0)))
    grid = (m_pad // tile,)

    vmem_need = fixed_bytes + per_row_bytes * tile + (2 << 20)
    vmem_limit = int(min(max(vmem_need, 32 << 20), 64 << 20))

    cost = pl.CostEstimate(
        flops=2 * m_pad * K_p * dmodel_p,
        transcendentals=0,
        bytes_accessed=(
            m_pad * K_p * csize            # patches in
            + K_p * dmodel_p * csize       # weight (resident, read once)
            + dmodel_p * 4                 # bias
            + m_pad * dmodel_p * osize     # output
        ),
    )

    out = pl.pallas_call(
        _patch_embed_kernel,
        out_shape=jax.ShapeDtypeStruct((m_pad, dmodel_p), out_dtype),
        grid_spec=pltpu.PrefetchScalarGridSpec(
            num_scalar_prefetch=0,
            grid=grid,
            in_specs=[
                pl.BlockSpec((tile, K_p), lambda i: (i, 0)),
                pl.BlockSpec((K_p, dmodel_p), lambda i: (0, 0)),   # resident
                pl.BlockSpec((1, dmodel_p), lambda i: (0, 0)),     # resident
            ],
            out_specs=pl.BlockSpec((tile, dmodel_p), lambda i: (i, 0)),
        ),
        compiler_params=pltpu.CompilerParams(
            # M axis is embarrassingly parallel over patches -> megacore on v7x.
            dimension_semantics=("parallel",),
            vmem_limit_bytes=vmem_limit,
        ),
        cost_estimate=cost,
    )(patches, w_mat, b_mat)

    # With typical ViT sizes (dmodel % 128 == 0, tile | M) this slice is a
    # no-op view; otherwise it trims the alignment padding.
    return out[:M, :dmodel].reshape(B, hp * wp, dmodel)


if __name__ == "__main__":
    # Small config consistent with the module's forward pass.
    B, C, H, W = 2, 4, 16, 16
    patch_size = 4
    dmodel = 32

    key = jax.random.PRNGKey(0)
    kx, kw, kb = jax.random.split(key, 3)

    x = jax.random.normal(kx, (B, C, H, W), dtype=jnp.float32)
    # Conv2d-shaped parameters: weight (dmodel, C, p, p), bias (dmodel,).
    fan_in = C * patch_size * patch_size
    bound = 1.0 / (fan_in ** 0.5)
    weight = jax.random.uniform(
        kw, (dmodel, C, patch_size, patch_size),
        minval=-bound, maxval=bound, dtype=jnp.float32,
    )
    bias = jax.random.uniform(
        kb, (dmodel,), minval=-bound, maxval=bound, dtype=jnp.float32
    )

    hp, wp = H // patch_size, W // patch_size

    def conv_ref(xr, wr):
        out = jax.lax.conv_general_dilated(
            xr, wr,
            window_strides=(patch_size, patch_size),
            padding="VALID",
            dimension_numbers=("NCHW", "OIHW", "NCHW"),
        ) + bias.reshape(1, dmodel, 1, 1)
        return out.transpose(0, 2, 3, 1).reshape(B, hp * wp, dmodel)

    # 1) Exact-dtype path (f32 operands on the MXU).
    out_f32 = patch_embeddings(x, weight, bias, patch_size,
                               compute_dtype=jnp.float32)
    jax.block_until_ready(out_f32)
    ref_f32 = conv_ref(x, weight)
    assert out_f32.shape == (B, hp * wp, dmodel), out_f32.shape
    assert jnp.allclose(out_f32, ref_f32, atol=1e-4, rtol=1e-4), float(
        jnp.max(jnp.abs(out_f32 - ref_f32)))

    # 2) Default fast path (bf16 operands, f32 accumulation); compare against a
    # reference fed the same bf16-rounded operands.
    out_fast = patch_embeddings(x, weight, bias, patch_size)
    jax.block_until_ready(out_fast)
    ref_fast = conv_ref(x.astype(jnp.bfloat16).astype(jnp.float32),
                        weight.astype(jnp.bfloat16).astype(jnp.float32))
    assert out_fast.shape == (B, hp * wp, dmodel), out_fast.shape
    assert jnp.allclose(out_fast, ref_fast, atol=2e-3, rtol=2e-3), float(
        jnp.max(jnp.abs(out_fast - ref_fast)))

    print("KERNEL_OK")
</pallas_src>

<mosaic_0001>
module attributes {stable_mosaic.version = 11 : i64} {
  func.func @_patch_embed_kernel(%arg0: i32, %arg1: memref<32x128xf32, #tpu.memory_space<vmem>>, %arg2: memref<128x128xf32, #tpu.memory_space<vmem>>, %arg3: memref<1x128xf32, #tpu.memory_space<vmem>>, %arg4: memref<32x128xf32, #tpu.memory_space<vmem>>) attributes {dimension_semantics = [#tpu.dimension_semantics<parallel>], iteration_bounds = array<i64: 1>, scalar_prefetch = 0 : i64, scratch_operands = 0 : i64, tpu.core_type = #tpu.core_type<tc>, window_params = [{transform_indices = @transform_0, window_bounds = array<i64: 32, 128>}, {pipeline_mode = #tpu.pipeline_mode<synchronous>, transform_indices = @transform_1, window_bounds = array<i64: 128, 128>}, {pipeline_mode = #tpu.pipeline_mode<synchronous>, transform_indices = @transform_2, window_bounds = array<i64: 1, 128>}, {transform_indices = @transform_3, window_bounds = array<i64: 32, 128>}]} {
    %c0 = arith.constant 0 : index
    %c0_0 = arith.constant 0 : index
    %0 = vector.load %arg1[%c0, %c0_0] : memref<32x128xf32, #tpu.memory_space<vmem>>, vector<32x128xf32>
    %c0_1 = arith.constant 0 : index
    %c0_2 = arith.constant 0 : index
    %1 = vector.load %arg2[%c0_1, %c0_2] : memref<128x128xf32, #tpu.memory_space<vmem>>, vector<128x128xf32>
    %cst = arith.constant dense<0.000000e+00> : vector<32x128xf32>
    %2 = tpu.matmul %0, %1, %cst {dimension_numbers = #tpu.dot_dimension_numbers<[1], [0], [0], [1], [0, 0, 1, 1], [], []>} : vector<32x128xf32>, vector<128x128xf32>, vector<32x128xf32> -> vector<32x128xf32>
    %c0_3 = arith.constant 0 : index
    %c0_4 = arith.constant 0 : index
    %3 = vector.load %arg3[%c0_3, %c0_4] : memref<1x128xf32, #tpu.memory_space<vmem>>, vector<1x128xf32>
    %4 = vector.broadcast %3 : vector<1x128xf32> to vector<32x128xf32>
    %5 = arith.addf %2, %4 : vector<32x128xf32>
    %c0_5 = arith.constant 0 : index
    %c0_6 = arith.constant 0 : index
    %6 = vector.load %arg4[%c0_5, %c0_6] : memref<32x128xf32, #tpu.memory_space<vmem>>, vector<32x128xf32>
    tpu.vector_store %arg4[%c0_5, %c0_6], %5 {strides = array<i32>} : memref<32x128xf32, #tpu.memory_space<vmem>>, vector<32x128xf32>,
    return
  }
  func.func @transform_0(%arg0: i32) -> (i32, i32) {
    %c0_i32 = arith.constant 0 : i32
    %c0_i32_0 = arith.constant 0 : i32
    return %arg0, %c0_i32 : i32, i32
  }
  func.func @transform_1(%arg0: i32) -> (i32, i32) {
    %c0_i32 = arith.constant 0 : i32
    %c0_i32_0 = arith.constant 0 : i32
    %c0_i32_1 = arith.constant 0 : i32
    return %c0_i32, %c0_i32_0 : i32, i32
  }
  func.func @transform_2(%arg0: i32) -> (i32, i32) {
    %c0_i32 = arith.constant 0 : i32
    %c0_i32_0 = arith.constant 0 : i32
    %c0_i32_1 = arith.constant 0 : i32
    return %c0_i32, %c0_i32_0 : i32, i32
  }
  func.func @transform_3(%arg0: i32) -> (i32, i32) {
    %c0_i32 = arith.constant 0 : i32
    %c0_i32_0 = arith.constant 0 : i32
    return %arg0, %c0_i32 : i32, i32
  }
}

</mosaic_0001>

<llo_original>
// kernel: tpu_custom_call.1
$region0: #{tpu_custom_call.1}
  #allocation0 [shape = 'u32[]', space=smem, size = 0x4, offset = 0x4, fixed_abs, tag = 'smem constant byte address 0x4 - core index']
  #allocation1 [shape = 'u32[72,128]{1,0:T(1,128)}', space=vmem, size = 0x9000, scoped, tag = 'internal scratch']
  %s0 = inlined_call_operand.hbm [shape: f32[32,128], index: 0, kind: input, shape index: {}]
  %s1 = inlined_call_operand.hbm [shape: f32[128,128], index: 1, kind: input, shape index: {}]
  %s2 = inlined_call_operand.vmem [shape: f32[1,128], index: 2, kind: input, shape index: {}]
  %s3 = inlined_call_operand.hbm [shape: f32[32,128], index: 3, kind: output, shape index: {}]
  %s4 = sld [smem:[#allocation0]]
  $region30: #{tpu_custom_call.1} parent=0
    _
  %s6 = ssub.s32 1, %s4
  %s7 = scalar_select 0, %s6, %s4
  $region1: #{tpu_custom_call.1} parent=0
    #allocation2 [shape = 'u8[16384]{0}', space=vmem, size = 0x4000, scoped, tag = 'input window, operand 0, single buffered']
    #allocation3 [shape = 's32[1]{0}', space=sflag, size = 0x4, scoped, tag = 'scoped memory for tpu_custom_call.1']
    #allocation4 [shape = 's32[1]{0}', space=sflag, size = 0x4, scoped, tag = 'scoped memory for tpu_custom_call.1']
    #allocation5 [shape = 'u8[65536]{0}', space=vmem, size = 0x10000, scoped, tag = 'input window, operand 1, single buffered']
    #allocation6 [shape = 's32[1]{0}', space=sflag, size = 0x4, scoped, tag = 'scoped memory for tpu_custom_call.1']
    #allocation7 [shape = 'u8[16384]{0}', space=vmem, size = 0x4000, scoped, tag = 'output window, operand 0, single buffered']
    %8 = vsyncpa [#allocation3], 0
    %9 = vsyncpa [#allocation6], 0
    %10 = vsyncpa [#allocation4], 0
    // Predicated region
    $region2: #{tpu_custom_call.1} parent=1 // pred_check
      _
    $region3: #{tpu_custom_call.1} parent=1 // pred_check_branch
      %12 = sbr.rel (0) target = $region5
    $region4: #{tpu_custom_call.1} parent=1 // pred_region
      %14 = vsyncadd [#allocation3], 0
      %s15 = sshll.u32 %s0, 4
      %s16 = int_to_ptr.hbm [resolvable:$true] %s15
      %s17 = sshll.u32 [#allocation2], 4
      %s18 = int_to_ptr.vmem [resolvable:$true] %s17
      %23 = dma.hbm_to_vmem [thread:$0]  %s16, 512, %s18, [#allocation3], 128, 128, 8
    $region5: #{tpu_custom_call.1} parent=1 // pred_fallthru
      _
    // Predicated region
    $region6: #{tpu_custom_call.1} parent=1 // pred_check
      _
    $region7: #{tpu_custom_call.1} parent=1 // pred_check_branch
      %25 = sbr.rel (0) target = $region9
    $region8: #{tpu_custom_call.1} parent=1 // pred_region
      %27 = vsyncadd [#allocation6], 0
      %s28 = sshll.u32 %s1, 4
      %s29 = int_to_ptr.hbm [resolvable:$true] %s28
      %s30 = sshll.u32 [#allocation5], 4
      %s31 = int_to_ptr.vmem [resolvable:$true] %s30
      %36 = dma.hbm_to_vmem [thread:$0]  %s29, 2048, %s31, [#allocation6], 128, 128, 8
    $region9: #{tpu_custom_call.1} parent=1 // pred_fallthru
      _
    // Predicated region
    $region10: #{tpu_custom_call.1} parent=1 // pred_check
      _
    $region11: #{tpu_custom_call.1} parent=1 // pred_check_branch
      %38 = sbr.rel (0) target = $region13
    $region12: #{tpu_custom_call.1} parent=1 // pred_region
      _
    $region13: #{tpu_custom_call.1} parent=1 // pred_fallthru
      _
    // Predicated region
    $region14: #{tpu_custom_call.1} parent=1 // pred_check
      _
    $region15: #{tpu_custom_call.1} parent=1 // pred_check_branch
      %40 = sbr.rel (0) target = $region17
    $region16: #{tpu_custom_call.1} parent=1 // pred_region
      %42 = dma.done [#allocation3], 512
    $region17: #{tpu_custom_call.1} parent=1 // pred_fallthru
      _
    // Predicated region
    $region18: #{tpu_custom_call.1} parent=1 // pred_check
      _
    $region19: #{tpu_custom_call.1} parent=1 // pred_check_branch
      %44 = sbr.rel (0) target = $region21
    $region20: #{tpu_custom_call.1} parent=1 // pred_region
      %46 = dma.done [#allocation6], 2048
    $region21: #{tpu_custom_call.1} parent=1 // pred_fallthru
      _
    %v47 = vld [vmem:[#allocation2] sm:$0xff]
    %v48 = vld [vmem:[#allocation2 + $0x8] sm:$0xff]
    %v49 = vld [vmem:[#allocation2 + $0x10] sm:$0xff]
    %v50 = vld [vmem:[#allocation2 + $0x18] sm:$0xff]
    %v51 = vld [vmem:[#allocation5] sm:$0xff]
    %v52 = vld [vmem:[#allocation5 + $0x8] sm:$0xff]
    %v53 = vld [vmem:[#allocation5 + $0x10] sm:$0xff]
    %v54 = vld [vmem:[#allocation5 + $0x18] sm:$0xff]
    %v55 = vld [vmem:[#allocation5 + $0x20] sm:$0xff]
    %v56 = vld [vmem:[#allocation5 + $0x28] sm:$0xff]
    %v57 = vld [vmem:[#allocation5 + $0x30] sm:$0xff]
    %v58 = vld [vmem:[#allocation5 + $0x38] sm:$0xff]
    %v59 = vld [vmem:[#allocation5 + $0x40] sm:$0xff]
    %v60 = vld [vmem:[#allocation5 + $0x48] sm:$0xff]
    %v61 = vld [vmem:[#allocation5 + $0x50] sm:$0xff]
    %v62 = vld [vmem:[#allocation5 + $0x58] sm:$0xff]
    %v63 = vld [vmem:[#allocation5 + $0x60] sm:$0xff]
    %v64 = vld [vmem:[#allocation5 + $0x68] sm:$0xff]
    %v65 = vld [vmem:[#allocation5 + $0x70] sm:$0xff]
    %v66 = vld [vmem:[#allocation5 + $0x78] sm:$0xff]
    %v67 = vld [vmem:[%s2] sm:$0x1]
    %v69 = vperm.slane %v67, 0
    %71 = vmatpush.msra.mxu0 %v66
    %72 = vmatpush.msra.mxu0 %v65
    %73 = vmatpush.msra.mxu0 %v64
    %74 = vmatpush.msra.mxu0 %v63
    %75 = vmatpush.msra.mxu0 %v62
    %76 = vmatpush.msra.mxu0 %v61
    %77 = vmatpush.msra.mxu0 %v60
    %78 = vmatpush.msra.mxu0 %v59
    %79 = vmatpush.msra.mxu0 %v58
    %80 = vmatpush.msra.mxu0 %v57
    %81 = vmatpush.msra.mxu0 %v56
    %82 = vmatpush.msra.mxu0 %v55
    %83 = vmatpush.msra.mxu0 %v54
    %84 = vmatpush.msra.mxu0 %v53
    %85 = vmatpush.msra.mxu0 %v52
    %86 = vmatpush.msra.mxu0 %v51
    %87 = vmatmul.f32.gmra.mxu0 %v47
    %v88 = vpop.f32.mrf.mxu0
    %v89 = vadd.f32 %v69, %v88
    %90 = vmatmul.f32.gmra.mxu0 %v48
    %v91 = vpop.f32.mrf.mxu0
    %v92 = vadd.f32 %v69, %v91
    %93 = vmatmul.f32.gmra.mxu0 %v49
    %v94 = vpop.f32.mrf.mxu0
    %v95 = vadd.f32 %v69, %v94
    %96 = vmatmul.f32.gmra.mxu0 %v50
    %v97 = vpop.f32.mrf.mxu0
    %v98 = vadd.f32 %v69, %v97
    %99 = vdwg.mxu0
    %100 = vst [vmem:[#allocation7] sm:$0xff] %v89
    %101 = vst [vmem:[#allocation7 + $0x8] sm:$0xff] %v92
    %102 = vst [vmem:[#allocation7 + $0x10] sm:$0xff] %v95
    %103 = vst [vmem:[#allocation7 + $0x18] sm:$0xff] %v98
    // Predicated region
    $region22: #{tpu_custom_call.1} parent=1 // pred_check
      _
    $region23: #{tpu_custom_call.1} parent=1 // pred_check_branch
      %105 = sbr.rel (0) target = $region25
    $region24: #{tpu_custom_call.1} parent=1 // pred_region
      %107 = vsyncadd [#allocation4], 0
      %s108 = sshll.u32 [#allocation7], 4
      %s109 = int_to_ptr.vmem [resolvable:$true] %s108
      %s110 = sshll.u32 %s3, 4
      %s111 = int_to_ptr.hbm [resolvable:$true] %s110
      %116 = dma.vmem_to_hbm [thread:$0]  %s109, 512, %s111, [#allocation4], 128, 128, 8
    $region25: #{tpu_custom_call.1} parent=1 // pred_fallthru
      _
    // Predicated region
    $region26: #{tpu_custom_call.1} parent=1 // pred_check
      _
    $region27: #{tpu_custom_call.1} parent=1 // pred_check_branch
      %118 = sbr.rel (0) target = $region29
    $region28: #{tpu_custom_call.1} parent=1 // pred_region
      %120 = dma.done [#allocation4], 512
    $region29: #{tpu_custom_call.1} parent=1 // pred_fallthru
      _
    %121 = vsyncpa [#allocation3], 1
    %122 = vsyncpa [#allocation6], 1
    %123 = vsyncpa [#allocation4], 1

</llo_original>
